<compile_context>
chip_gen: v5e
topology: v5e:2x2
jax: 0.10.0
libtpu: 0.0.40
codegen_flags: <defaults>
</compile_context>

<pallas_src>
import math

import jax
import jax.numpy as jnp
from jax.experimental import pallas as pl
from jax.experimental.pallas import tpu as pltpu


def _round_up(x, m):
    return (x + m - 1) // m * m


def _cdiv(a, b):
    return -(-a // b)


def _vmem_capacity_bytes():
    """Physical per-core VMEM; conservative 64 MiB fallback valid on all gens."""
    try:
        return int(pltpu.get_tpu_info().vmem_capacity_bytes)
    except Exception:
        return 64 << 20


def _choose_row_tile(n_rows, k_width, itemsize, a_buf_bytes, want_tiles=2):
    """Pick an 8-aligned row tile tm and padded row count.

    tm is the largest (<=512) tile keeping one (tm, k_width) A block under
    a_buf_bytes, chosen to minimize row padding (pads only to num_tiles*tm) and
    to yield at least `want_tiles` row tiles so the "parallel" grid axis can be
    split across v7x's two TensorCores."""
    n8 = _round_up(n_rows, 8)
    cap = max(8, min(512, (a_buf_bytes // max(k_width * itemsize, 1)) // 8 * 8))
    num_tiles = max(_cdiv(n8, cap), 1)
    if num_tiles < want_tiles and n8 >= 8 * want_tiles:
        num_tiles = want_tiles
    tm = _round_up(_cdiv(n8, num_tiles), 8)
    num_tiles = _cdiv(n8, tm)
    return tm, num_tiles * tm


def _rgc_kernel_fw_resident(a_ref, fw_ref, b_ref, o_ref):
    # Grid: (row tile i [parallel], relation r [arbitrary / reduction]).
    # fw_ref (R, Kp, Hp) is resident in VMEM (constant index map -> one fetch).
    r = pl.program_id(1)

    @pl.when(r == 0)
    def _():
        o_ref[...] = jnp.zeros_like(o_ref)

    # acc += A[r] rows @ FW[r]      (tm, Kp) @ (Kp, Hp) -> (tm, Hp), f32 accumulate.
    o_ref[...] += jnp.dot(a_ref[...], fw_ref[r],
                          preferred_element_type=jnp.float32)

    @pl.when(r == pl.num_programs(1) - 1)
    def _():
        o_ref[...] = o_ref[...] + b_ref[...]


def _rgc_kernel_k_tiled(a_ref, fw_ref, b_ref, o_ref):
    # Grid: (row tile i [parallel], relation r, K tile k) -- r, k are reductions.
    r = pl.program_id(1)
    k = pl.program_id(2)

    @pl.when(jnp.logical_and(r == 0, k == 0))
    def _():
        o_ref[...] = jnp.zeros_like(o_ref)

    # acc += A[r] (tm, tk) block @ FW[r] (tk, Hp) block, f32 accumulate.
    o_ref[...] += jnp.dot(a_ref[...], fw_ref[...],
                          preferred_element_type=jnp.float32)

    @pl.when(jnp.logical_and(r == pl.num_programs(1) - 1,
                             k == pl.num_programs(2) - 1))
    def _():
        o_ref[...] = o_ref[...] + b_ref[...]


def rgc_layer(features, A_stacked, weights, bias, *,
              compute_dtype=jnp.bfloat16, force_k_tiled=False, tk=None):
    """features: (N, in_dim), A_stacked: (R, N, N), weights: (R*in_dim, h_dim),
    bias: (h_dim,)  ->  (N, h_dim) float32."""
    N, in_dim = features.shape
    R = A_stacked.shape[0]
    h_dim = weights.shape[1]
    assert weights.shape[0] == R * in_dim

    itemsize = jnp.dtype(compute_dtype).itemsize

    # ---- Generation-aware VMEM budget ------------------------------------
    vmem_cap = _vmem_capacity_bytes()
    if vmem_cap >= (100 << 20):        # v5e / v6e: 128 MiB physical VMEM
        vmem_limit = 100 << 20
        a_buf_default = 24 << 20       # -> 256-512 row tiles on big graphs
    else:                              # v7x: 64 MiB per TensorCore
        vmem_limit = 52 << 20
        a_buf_default = 8 << 20
    budget = vmem_limit - (4 << 20)    # headroom for compiler-internal scratch

    # ---- Hoist the tiny K=in_dim matmul out of the kernel ------------------
    # FW[r] = features @ W_r, cast directly to the streaming dtype.
    w3 = weights.reshape(R, in_dim, h_dim)
    fw = jnp.einsum('nd,rdh->rnh', features, w3,
                    preferred_element_type=jnp.float32).astype(compute_dtype)

    # ---- Padding: lane-dense Hp, lane-aligned contraction dim Kp ----------
    Hp = _round_up(h_dim, 128)
    Kp = _round_up(N, 128)

    fw_bytes = R * Kp * Hp * itemsize
    # FW-resident path only if a (conservatively double-buffered) FW copy fits.
    use_resident = (not force_k_tiled) and (2 * fw_bytes <= budget // 2)

    if use_resident:
        a_buf_bytes = max(2 << 20, min(a_buf_default, (budget - 2 * fw_bytes) // 4))
        tm, n_pad = _choose_row_tile(N, Kp, itemsize, a_buf_bytes)
    else:
        if tk is None:
            tk = min(512, Kp)
        tk = _round_up(tk, 128)
        Kp = _round_up(Kp, tk)
        a_buf_bytes = max(2 << 20, min(a_buf_default, budget // 4))
        tm, n_pad = _choose_row_tile(N, tk, itemsize, a_buf_bytes)

    a_p = jnp.pad(A_stacked,
                  ((0, 0), (0, n_pad - N), (0, Kp - N))).astype(compute_dtype)
    fw_p = jnp.pad(fw, ((0, 0), (0, Kp - N), (0, Hp - h_dim)))
    b_p = jnp.pad(bias.astype(jnp.float32), (0, Hp - h_dim)).reshape(1, Hp)

    flops = 2 * R * n_pad * Kp * Hp
    bytes_accessed = ((R * n_pad * Kp + R * Kp * Hp) * itemsize
                      + n_pad * Hp * 4 + Hp * 4)
    cost = pl.CostEstimate(flops=flops, transcendentals=0,
                           bytes_accessed=bytes_accessed)

    if use_resident:
        grid = (n_pad // tm, R)
        out = pl.pallas_call(
            _rgc_kernel_fw_resident,
            out_shape=jax.ShapeDtypeStruct((n_pad, Hp), jnp.float32),
            grid_spec=pltpu.PrefetchScalarGridSpec(
                num_scalar_prefetch=0,
                grid=grid,
                in_specs=[
                    # A[r] row tile (tm, Kp): relation dim squeezed, streamed once.
                    pl.BlockSpec((None, tm, Kp), lambda i, r: (r, i, 0)),
                    # FW fully resident in VMEM: constant index -> fetched once.
                    pl.BlockSpec((R, Kp, Hp), lambda i, r: (0, 0, 0)),
                    # bias: constant (1, Hp) tile.
                    pl.BlockSpec((1, Hp), lambda i, r: (0, 0)),
                ],
                # Output block resident across the r (reduction) axis.
                out_specs=pl.BlockSpec((tm, Hp), lambda i, r: (i, 0)),
            ),
            compiler_params=pltpu.CompilerParams(
                dimension_semantics=("parallel", "arbitrary"),
                vmem_limit_bytes=vmem_limit),
            cost_estimate=cost,
        )(a_p, fw_p, b_p)
    else:
        grid = (n_pad // tm, R, Kp // tk)
        out = pl.pallas_call(
            _rgc_kernel_k_tiled,
            out_shape=jax.ShapeDtypeStruct((n_pad, Hp), jnp.float32),
            grid_spec=pltpu.PrefetchScalarGridSpec(
                num_scalar_prefetch=0,
                grid=grid,
                in_specs=[
                    # A[r] (tm, tk) block.
                    pl.BlockSpec((None, tm, tk), lambda i, r, k: (r, i, k)),
                    # FW[r] (tk, Hp) block.
                    pl.BlockSpec((None, tk, Hp), lambda i, r, k: (r, k, 0)),
                    # bias: constant (1, Hp) tile.
                    pl.BlockSpec((1, Hp), lambda i, r, k: (0, 0)),
                ],
                # Output block resident across both reduction axes (r, k).
                out_specs=pl.BlockSpec((tm, Hp), lambda i, r, k: (i, 0)),
            ),
            compiler_params=pltpu.CompilerParams(
                dimension_semantics=("parallel", "arbitrary", "arbitrary"),
                vmem_limit_bytes=vmem_limit),
            cost_estimate=cost,
        )(a_p, fw_p, b_p)

    return out[:N, :h_dim]


def rgc_reference(features, A_stacked, weights, bias):
    supports = jnp.concatenate(
        [A_stacked[r] @ features for r in range(A_stacked.shape[0])], axis=1)
    return supports @ weights + bias


if __name__ == "__main__":
    # ---- Test 1: small shapes consistent with the module -------------------
    N = 16          # number of graph nodes
    in_dim = 8      # input feature dim
    h_dim = 32      # hidden dim
    adj_nums = 3    # number of relations / adjacency matrices

    key = jax.random.PRNGKey(0)
    k_feat, k_adj, k_w, k_feat2, k_adj2, k_w2 = jax.random.split(key, 6)

    features = jax.random.normal(k_feat, (N, in_dim), dtype=jnp.float32)
    A_stacked = jax.random.normal(k_adj, (adj_nums, N, N), dtype=jnp.float32)

    # Deterministic xavier_uniform_ init for weights, zeros for bias.
    fan_in, fan_out = adj_nums * in_dim, h_dim
    bound = math.sqrt(6.0 / (fan_in + fan_out))
    weights = jax.random.uniform(
        k_w, (adj_nums * in_dim, h_dim), dtype=jnp.float32,
        minval=-bound, maxval=bound)
    bias = jnp.zeros((h_dim,), dtype=jnp.float32)

    ref = rgc_reference(features, A_stacked, weights, bias)

    # Full-f32 compute path: tight check against the reference.
    out_f32 = jax.block_until_ready(
        rgc_layer(features, A_stacked, weights, bias, compute_dtype=jnp.float32))
    assert out_f32.shape == (N, h_dim)
    assert jnp.allclose(out_f32, ref, atol=1e-4, rtol=1e-4), "f32 mismatch vs reference"

    # Default bf16-streaming path (perf config): f32 accumulation; looser tolerance
    # only because the inputs are rounded to bf16.
    out_bf16 = jax.block_until_ready(rgc_layer(features, A_stacked, weights, bias))
    assert out_bf16.shape == (N, h_dim)
    assert jnp.allclose(out_bf16, ref, atol=5e-2, rtol=5e-2), "bf16 mismatch vs reference"

    # ---- Test 2: exercise the K-tiled fallback path (large-graph path) -----
    N2, R2 = 144, 2
    features2 = jax.random.normal(k_feat2, (N2, in_dim), dtype=jnp.float32)
    A2 = jax.random.normal(k_adj2, (R2, N2, N2), dtype=jnp.float32)
    weights2 = jax.random.uniform(k_w2, (R2 * in_dim, h_dim), dtype=jnp.float32,
                                  minval=-bound, maxval=bound)
    ref2 = rgc_reference(features2, A2, weights2, bias)
    out2 = jax.block_until_ready(
        rgc_layer(features2, A2, weights2, bias, compute_dtype=jnp.float32,
                  force_k_tiled=True, tk=128))
    assert out2.shape == (N2, h_dim)
    assert jnp.allclose(out2, ref2, atol=1e-3, rtol=1e-3), "k-tiled mismatch vs reference"

    print("KERNEL_OK")
</pallas_src>

<mosaic_0001>
module attributes {stable_mosaic.version = 11 : i64} {
  func.func @_rgc_kernel_fw_resident(%arg0: i32, %arg1: i32, %arg2: memref<1x8x128xf32, #tpu.memory_space<vmem>>, %arg3: memref<3x128x128xf32, #tpu.memory_space<vmem>>, %arg4: memref<1x128xf32, #tpu.memory_space<vmem>>, %arg5: memref<8x128xf32, #tpu.memory_space<vmem>>) attributes {dimension_semantics = [#tpu.dimension_semantics<parallel>, #tpu.dimension_semantics<arbitrary>], iteration_bounds = array<i64: 2, 3>, scalar_prefetch = 0 : i64, scratch_operands = 0 : i64, tpu.core_type = #tpu.core_type<tc>, window_params = [{transform_indices = @transform_0, window_bounds = array<i64: 1, 8, 128>}, {pipeline_mode = #tpu.pipeline_mode<synchronous>, transform_indices = @transform_1, window_bounds = array<i64: 3, 128, 128>}, {pipeline_mode = #tpu.pipeline_mode<synchronous>, transform_indices = @transform_2, window_bounds = array<i64: 1, 128>}, {transform_indices = @transform_3, window_bounds = array<i64: 8, 128>}]} {
    %c0_i32 = arith.constant 0 : i32
    %0 = arith.cmpi eq, %arg1, %c0_i32 : i32
    %1 = arith.extui %0 : i1 to i32
    %c0_i32_0 = arith.constant 0 : i32
    %2 = arith.cmpi ne, %1, %c0_i32_0 : i32
    scf.if %2 {
      %cst_10 = arith.constant 0.000000e+00 : f32
      %15 = vector.broadcast %cst_10 : f32 to vector<8x128xf32>
      %c0_11 = arith.constant 0 : index
      %c0_12 = arith.constant 0 : index
      %16 = vector.load %arg5[%c0_11, %c0_12] : memref<8x128xf32, #tpu.memory_space<vmem>>, vector<8x128xf32>
      tpu.vector_store %arg5[%c0_11, %c0_12], %15 {strides = array<i32>} : memref<8x128xf32, #tpu.memory_space<vmem>>, vector<8x128xf32>,
    } else {
    }
    %c0 = arith.constant 0 : index
    %c0_1 = arith.constant 0 : index
    %3 = vector.load %arg5[%c0, %c0_1] : memref<8x128xf32, #tpu.memory_space<vmem>>, vector<8x128xf32>
    %c0_2 = arith.constant 0 : index
    %c0_3 = arith.constant 0 : index
    %c0_4 = arith.constant 0 : index
    %4 = vector.load %arg2[%c0_2, %c0_3, %c0_4] : memref<1x8x128xf32, #tpu.memory_space<vmem>>, vector<1x8x128xf32>
    %5 = vector.shape_cast %4 : vector<1x8x128xf32> to vector<8x128xf32>
    %6 = arith.index_cast %arg1 : i32 to index
    %c0_5 = arith.constant 0 : index
    %c0_6 = arith.constant 0 : index
    %7 = vector.load %arg3[%6, %c0_5, %c0_6] : memref<3x128x128xf32, #tpu.memory_space<vmem>>, vector<1x128x128xf32>
    %8 = vector.shape_cast %7 : vector<1x128x128xf32> to vector<128x128xf32>
    %cst = arith.constant dense<0.000000e+00> : vector<8x128xf32>
    %9 = tpu.matmul %5, %8, %cst {dimension_numbers = #tpu.dot_dimension_numbers<[1], [0], [0], [1], [0, 0, 1, 1], [], []>} : vector<8x128xf32>, vector<128x128xf32>, vector<8x128xf32> -> vector<8x128xf32>
    %10 = arith.addf %3, %9 : vector<8x128xf32>
    %c0_7 = arith.constant 0 : index
    %c0_8 = arith.constant 0 : index
    %11 = vector.load %arg5[%c0_7, %c0_8] : memref<8x128xf32, #tpu.memory_space<vmem>>, vector<8x128xf32>
    tpu.vector_store %arg5[%c0_7, %c0_8], %10 {strides = array<i32>} : memref<8x128xf32, #tpu.memory_space<vmem>>, vector<8x128xf32>,
    %c2_i32 = arith.constant 2 : i32
    %12 = arith.cmpi eq, %arg1, %c2_i32 : i32
    %13 = arith.extui %12 : i1 to i32
    %c0_i32_9 = arith.constant 0 : i32
    %14 = arith.cmpi ne, %13, %c0_i32_9 : i32
    scf.if %14 {
      %c0_10 = arith.constant 0 : index
      %c0_11 = arith.constant 0 : index
      %15 = vector.load %arg5[%c0_10, %c0_11] : memref<8x128xf32, #tpu.memory_space<vmem>>, vector<8x128xf32>
      %c0_12 = arith.constant 0 : index
      %c0_13 = arith.constant 0 : index
      %16 = vector.load %arg4[%c0_12, %c0_13] : memref<1x128xf32, #tpu.memory_space<vmem>>, vector<1x128xf32>
      %17 = vector.broadcast %16 : vector<1x128xf32> to vector<8x128xf32>
      %18 = arith.addf %15, %17 : vector<8x128xf32>
      %c0_14 = arith.constant 0 : index
      %c0_15 = arith.constant 0 : index
      %19 = vector.load %arg5[%c0_14, %c0_15] : memref<8x128xf32, #tpu.memory_space<vmem>>, vector<8x128xf32>
      tpu.vector_store %arg5[%c0_14, %c0_15], %18 {strides = array<i32>} : memref<8x128xf32, #tpu.memory_space<vmem>>, vector<8x128xf32>,
    } else {
    }
    return
  }
  func.func @transform_0(%arg0: i32, %arg1: i32) -> (i32, i32, i32) {
    %c0_i32 = arith.constant 0 : i32
    %c0_i32_0 = arith.constant 0 : i32
    return %arg1, %arg0, %c0_i32 : i32, i32, i32
  }
  func.func @transform_1(%arg0: i32, %arg1: i32) -> (i32, i32, i32) {
    %c0_i32 = arith.constant 0 : i32
    %c0_i32_0 = arith.constant 0 : i32
    %c0_i32_1 = arith.constant 0 : i32
    %c0_i32_2 = arith.constant 0 : i32
    return %c0_i32, %c0_i32_0, %c0_i32_1 : i32, i32, i32
  }
  func.func @transform_2(%arg0: i32, %arg1: i32) -> (i32, i32) {
    %c0_i32 = arith.constant 0 : i32
    %c0_i32_0 = arith.constant 0 : i32
    %c0_i32_1 = arith.constant 0 : i32
    return %c0_i32, %c0_i32_0 : i32, i32
  }
  func.func @transform_3(%arg0: i32, %arg1: i32) -> (i32, i32) {
    %c0_i32 = arith.constant 0 : i32
    %c0_i32_0 = arith.constant 0 : i32
    return %arg0, %c0_i32 : i32, i32
  }
}

</mosaic_0001>

<llo_original>
// kernel: tpu_custom_call.1
$region0: #{tpu_custom_call.1}
  #allocation0 [shape = 'u32[]', space=smem, size = 0x4, offset = 0x4, fixed_abs, tag = 'smem constant byte address 0x4 - core index']
  #allocation1 [shape = 'u32[72,128]{1,0:T(1,128)}', space=vmem, size = 0x9000, scoped, tag = 'internal scratch']
  %s0 = inlined_call_operand.hbm [shape: f32[3,16,128], index: 0, kind: input, shape index: {}]
  %s1 = inlined_call_operand.hbm [shape: f32[3,128,128], index: 1, kind: input, shape index: {}]
  %s2 = inlined_call_operand.vmem [shape: f32[1,128], index: 2, kind: input, shape index: {}]
  %s3 = inlined_call_operand.hbm [shape: f32[16,128], index: 3, kind: output, shape index: {}]
  %s4 = sld [smem:[#allocation0]]
  $region61: #{tpu_custom_call.1} parent=0
    _
  %s6 = ssub.s32 1, %s4
  %s7 = scalar_select 0, %s6, %s4
  $region1: #{tpu_custom_call.1} parent=0
    #allocation2 [shape = 'u8[8192]{0}', space=vmem, size = 0x2000, scoped, tag = 'input window, operand 0']
    #allocation3 [shape = 's32[2]{0}', space=sflag, size = 0x8, scoped, tag = 'scoped memory for tpu_custom_call.1']
    #allocation4 [shape = 's32[2]{0}', space=sflag, size = 0x8, scoped, tag = 'scoped memory for tpu_custom_call.1']
    #allocation5 [shape = 'u8[196608]{0}', space=vmem, size = 0x30000, scoped, tag = 'input window, operand 1, single buffered']
    #allocation6 [shape = 's32[1]{0}', space=sflag, size = 0x4, scoped, tag = 'scoped memory for tpu_custom_call.1']
    #allocation7 [shape = 'u8[8192]{0}', space=vmem, size = 0x2000, scoped, tag = 'output window, operand 0']
    %8 = vsyncpa [#allocation3], 0
    %s9 = scalar_lea.sflag [#allocation3], 1
    %10 = vsyncpa %s9, 0
    %11 = vsyncpa [#allocation6], 0
    %12 = vsyncpa [#allocation4], 0
    %s13 = scalar_lea.sflag [#allocation4], 1
    %14 = vsyncpa %s13, 0
    loop: start=0, step=1, limit=8
    $region2: #{tpu_custom_call.1} parent=1 // loop_pre_header
      _
    $region3: #{tpu_custom_call.1} parent=1 // loop_header
      %s16 = sphi 0, %s20
      %p17 = scmp.ge.s32.totalorder %s16, 8
      %s23 = sphi 0, %s35
      %s24 = sphi 0, %s31
      %s25 = sphi 0, %s23
      %s26 = sphi 0, %s24
      %s27 = sphi 0, %s25
      %s28 = sphi 0, %s26
      %s40 = sphi 0, %s42
      %s43 = sphi 0, %s40
      %s44 = sphi 0, %s43
      %s60 = sphi 0, %s44
      %s64 = sphi 0, %s64
      %s66 = sphi 0, %s64
      %s67 = sphi 0, %s66
      %s81 = sphi 0, %s67
      %s85 = sphi 0, %s85
      %s87 = sphi 0, %s85
      %s88 = sphi 0, %s87
      %s102 = sphi 0, %s88
      %s108 = sphi 0, %s110
      %s111 = sphi 0, %s108
      %s112 = sphi 0, %s111
      %s128 = sphi 0, %s112
    $region4: #{tpu_custom_call.1} parent=1 // loop_header_branch
      %19 = sbr.rel (%p17) target = $region8
    $region5: #{tpu_custom_call.1} parent=1 // loop_body
      %s21 = ssub.s32 %s16, 1
      %s22 = ssub.s32 %s16, 2
      %s29 = sadd.s32 1, %s24
      %p30 = scmp.ge.s32.totalorder %s29, 3
      %s31 = scalar_select %p30, 0, %s29
      %s32 = sadd.s32 1, %s23
      %s33 = scalar_select %p30, %s32, %s23
      %p34 = scmp.ge.s32.totalorder %s33, 2
      %s35 = scalar_select %p34, 0, %s33
      %s36 = ssub.s32 %s24, %s31
      %s37 = ssub.s32 %s23, %s35
      %s38 = sor.u32 %s36, %s37
      %p39 = scmp.eq.s32.totalorder %s38, 0
      %s41 = sadd.s32 %s40, 1
      %s42 = scalar_select %p39, %s40, %s41
      %p45 = pneg %p39
      %p46 = scmp.eq.s32.totalorder %s16, 5
      %p47 = por %p45, %p46
      %p48 = scmp.ne.s32.totalorder %s40, %s43
      %p49 = scmp.eq.s32.totalorder %s16, 0
      %p50 = por %p48, %p49
      %p51 = scmp.ne.s32.totalorder %s40, %s43
      %p52 = scmp.eq.s32.totalorder %s21, 5
      %p53 = por %p51, %p52
      %p54 = scmp.ne.s32.totalorder %s43, %s44
      %p55 = scmp.eq.s32.totalorder %s21, 0
      %p56 = por %p54, %p55
      %p57 = scmp.ne.s32.totalorder %s43, %s44
      %p58 = scmp.eq.s32.totalorder %s22, 5
      %p59 = por %p57, %p58
      %p61 = scmp.ne.s32.totalorder %s44, %s60
      %p62 = scmp.eq.s32.totalorder %s22, 0
      %p63 = por %p61, %p62
      %s65 = sadd.s32 %s64, 1
      %p68 = scmp.eq.s32.totalorder %s16, 5
      %p69 = scmp.ne.s32.totalorder %s64, %s66
      %p70 = scmp.eq.s32.totalorder %s16, 0
      %p71 = por %p69, %p70
      %p72 = scmp.ne.s32.totalorder %s64, %s66
      %p73 = scmp.eq.s32.totalorder %s21, 5
      %p74 = por %p72, %p73
      %p75 = scmp.ne.s32.totalorder %s66, %s67
      %p76 = scmp.eq.s32.totalorder %s21, 0
      %p77 = por %p75, %p76
      %p78 = scmp.ne.s32.totalorder %s66, %s67
      %p79 = scmp.eq.s32.totalorder %s22, 5
      %p80 = por %p78, %p79
      %p82 = scmp.ne.s32.totalorder %s67, %s81
      %p83 = scmp.eq.s32.totalorder %s22, 0
      %p84 = por %p82, %p83
      %s86 = sadd.s32 %s85, 1
      %p89 = scmp.eq.s32.totalorder %s16, 5
      %p90 = scmp.ne.s32.totalorder %s85, %s87
      %p91 = scmp.eq.s32.totalorder %s16, 0
      %p92 = por %p90, %p91
      %p93 = scmp.ne.s32.totalorder %s85, %s87
      %p94 = scmp.eq.s32.totalorder %s21, 5
      %p95 = por %p93, %p94
      %p96 = scmp.ne.s32.totalorder %s87, %s88
      %p97 = scmp.eq.s32.totalorder %s21, 0
      %p98 = por %p96, %p97
      %p99 = scmp.ne.s32.totalorder %s87, %s88
      %p100 = scmp.eq.s32.totalorder %s22, 5
      %p101 = por %p99, %p100
      %p103 = scmp.ne.s32.totalorder %s88, %s102
      %p104 = scmp.eq.s32.totalorder %s22, 0
      %p105 = por %p103, %p104
      %s106 = ssub.s32 %s23, %s35
      %p107 = scmp.eq.s32.totalorder %s106, 0
      %s109 = sadd.s32 %s108, 1
      %s110 = scalar_select %p107, %s108, %s109
      %p113 = pneg %p107
      %p114 = scmp.eq.s32.totalorder %s16, 5
      %p115 = por %p113, %p114
      %p116 = scmp.ne.s32.totalorder %s108, %s111
      %p117 = scmp.eq.s32.totalorder %s16, 0
      %p118 = por %p116, %p117
      %p119 = scmp.ne.s32.totalorder %s108, %s111
      %p120 = scmp.eq.s32.totalorder %s21, 5
      %p121 = por %p119, %p120
      %p122 = scmp.ne.s32.totalorder %s111, %s112
      %p123 = scmp.eq.s32.totalorder %s21, 0
      %p124 = por %p122, %p123
      %p125 = scmp.ne.s32.totalorder %s111, %s112
      %p126 = scmp.eq.s32.totalorder %s22, 5
      %p127 = por %p125, %p126
      %p129 = scmp.ne.s32.totalorder %s112, %s128
      %p130 = scmp.eq.s32.totalorder %s22, 0
      %p131 = por %p129, %p130
      %p132 = scmp.le.s32.totalorder 1, %s16
      %p133 = scmp.lt.s32.totalorder %s16, 7
      %p134 = pnand %p132, %p133
      %p135 = pneg %p134
      // Predicated region
      $region9: #{tpu_custom_call.1} parent=5 // pred_check
        _
      $region10: #{tpu_custom_call.1} parent=5 // pred_check_branch
        %137 = sbr.rel (%p134) target = $region12
      $region11: #{tpu_custom_call.1} parent=5 // pred_region
        %s138 = ssub.s32 %s16, 1
        // Predicated region
        $region13: #{tpu_custom_call.1} parent=11 // pred_check
          %p139 = pneg %p77
        $region14: #{tpu_custom_call.1} parent=11 // pred_check_branch
          %141 = sbr.rel (%p139) target = $region16
        $region15: #{tpu_custom_call.1} parent=11 // pred_region
          %143 = vsyncadd [#allocation6], 0
          %s144 = sshll.u32 %s1, 4
          %s145 = int_to_ptr.hbm [resolvable:$true] %s144
          %s146 = sshll.u32 [#allocation5], 4
          %s147 = int_to_ptr.vmem [resolvable:$true] %s146
          %152 = dma.hbm_to_vmem [thread:$0]  %s145, 6144, %s147, [#allocation6], 128, 128, 8
        $region16: #{tpu_custom_call.1} parent=11 // pred_fallthru
          _
        // Predicated region
        $region17: #{tpu_custom_call.1} parent=11 // pred_check
          %p153 = pneg %p98
        $region18: #{tpu_custom_call.1} parent=11 // pred_check_branch
          %155 = sbr.rel (%p153) target = $region20
        $region19: #{tpu_custom_call.1} parent=11 // pred_region
          _
        $region20: #{tpu_custom_call.1} parent=11 // pred_fallthru
          _
      $region12: #{tpu_custom_call.1} parent=5 // pred_fallthru
        _
      %p156 = scmp.lt.s32.totalorder %s16, 6
      // Predicated region
      $region21: #{tpu_custom_call.1} parent=5 // pred_check
        %p157 = pneg %p156
      $region22: #{tpu_custom_call.1} parent=5 // pred_check_branch
        %159 = sbr.rel (%p157) target = $region24
      $region23: #{tpu_custom_call.1} parent=5 // pred_region
        // Predicated region
        $region25: #{tpu_custom_call.1} parent=23 // pred_check
          %p160 = pneg %p50
        $region26: #{tpu_custom_call.1} parent=23 // pred_check_branch
          %162 = sbr.rel (%p160) target = $region28
        $region27: #{tpu_custom_call.1} parent=23 // pred_region
          %s163 = sand.u32 %s40, 1
          %s164 = scalar_lea.sflag [#allocation3], %s163
          %s165 = sand.u32 %s40, 1
          %s166 = smul.addr %s165, 8
          %s167 = scalar_lea.vmem [#allocation2], %s166
          %169 = vsyncadd %s164, 0
          %s170 = smul.addr %s24, 2
          %s171 = sadd.s32 %s23, %s170
          %s172 = smul.addr %s171, 8
          %s173 = scalar_lea.hbm %s0, %s172
          %s175 = sshll.u32 %s173, 4
          %s176 = int_to_ptr.hbm [resolvable:$true] %s175
          %s177 = sshll.u32 %s167, 4
          %s178 = int_to_ptr.vmem [resolvable:$true] %s177
          %180 = dma.hbm_to_vmem [thread:$0]  %s176, 128, %s178, %s164
        $region28: #{tpu_custom_call.1} parent=23 // pred_fallthru
          _
      $region24: #{tpu_custom_call.1} parent=5 // pred_fallthru
        _
      %p181 = scmp.le.s32.totalorder 1, %s16
      %p182 = scmp.lt.s32.totalorder %s16, 7
      %p183 = pnand %p181, %p182
      %p184 = pneg %p183
      // Predicated region
      $region29: #{tpu_custom_call.1} parent=5 // pred_check
        _
      $region30: #{tpu_custom_call.1} parent=5 // pred_check_branch
        %186 = sbr.rel (%p183) target = $region32
      $region31: #{tpu_custom_call.1} parent=5 // pred_region
        %s187 = ssub.s32 %s16, 1
        %s188 = sand.u32 %s43, 1
        %s189 = scalar_lea.sflag [#allocation3], %s188
        %s190 = sand.u32 %s43, 1
        %s191 = smul.addr %s190, 8
        %s192 = scalar_lea.vmem [#allocation2], %s191
        // Predicated region
        $region33: #{tpu_custom_call.1} parent=31 // pred_check
          %p193 = pneg %p56
        $region34: #{tpu_custom_call.1} parent=31 // pred_check_branch
          %195 = sbr.rel (%p193) target = $region36
        $region35: #{tpu_custom_call.1} parent=31 // pred_region
          %197 = dma.done %s189, 128
        $region36: #{tpu_custom_call.1} parent=31 // pred_fallthru
          _
        // Predicated region
        $region37: #{tpu_custom_call.1} parent=31 // pred_check
          %p198 = pneg %p77
        $region38: #{tpu_custom_call.1} parent=31 // pred_check_branch
          %200 = sbr.rel (%p198) target = $region40
        $region39: #{tpu_custom_call.1} parent=31 // pred_region
          %202 = dma.done [#allocation6], 6144
        $region40: #{tpu_custom_call.1} parent=31 // pred_fallthru
          _
        %s203 = sand.u32 %s43, 1
        %s204 = scalar_lea.sflag [#allocation3], %s203
        %s205 = sand.u32 %s43, 1
        %s206 = smul.addr %s205, 8
        %s207 = scalar_lea.vmem [#allocation2], %s206
        %p208 = pneg %p56
        %p209 = pneg %p53
        %p210 = pneg %p77
        %p211 = pneg %p74
        %p212 = pneg %p98
        %p213 = pneg %p95
        %p214 = pneg %p124
        %p215 = pneg %p121
        %s216 = sand.u32 %s111, 1
        %s217 = scalar_lea.sflag [#allocation4], %s216
        %s218 = sand.u32 %s111, 1
        %s219 = smul.addr %s218, 8
        %s220 = scalar_lea.vmem [#allocation7], %s219
        %p221 = scmp.eq.s32.totalorder %s26, 0
        // Predicated region
        $region41: #{tpu_custom_call.1} parent=31 // pred_check
          %p222 = pneg %p221
        $region42: #{tpu_custom_call.1} parent=31 // pred_check_branch
          %224 = sbr.rel (%p222) target = $region44
        $region43: #{tpu_custom_call.1} parent=31 // pred_region
          %225 = vst [vmem:[%s220] sm:$0xff] 0.0
        $region44: #{tpu_custom_call.1} parent=31 // pred_fallthru
          _
        %v226 = vld [vmem:[%s220] sm:$0xff]
        %v227 = vld [vmem:[%s192] sm:$0xff]
        %s228 = smul.u32 %s26, 128
        %s229 = scalar_lea.vmem [#allocation5], %s228
        %v230 = vld [vmem:[%s229] sm:$0xff]
        %v231 = vld [vmem:[%s229 + $0x8] sm:$0xff]
        %v232 = vld [vmem:[%s229 + $0x10] sm:$0xff]
        %v233 = vld [vmem:[%s229 + $0x18] sm:$0xff]
        %v234 = vld [vmem:[%s229 + $0x20] sm:$0xff]
        %v235 = vld [vmem:[%s229 + $0x28] sm:$0xff]
        %v236 = vld [vmem:[%s229 + $0x30] sm:$0xff]
        %v237 = vld [vmem:[%s229 + $0x38] sm:$0xff]
        %v238 = vld [vmem:[%s229 + $0x40] sm:$0xff]
        %v239 = vld [vmem:[%s229 + $0x48] sm:$0xff]
        %v240 = vld [vmem:[%s229 + $0x50] sm:$0xff]
        %v241 = vld [vmem:[%s229 + $0x58] sm:$0xff]
        %v242 = vld [vmem:[%s229 + $0x60] sm:$0xff]
        %v243 = vld [vmem:[%s229 + $0x68] sm:$0xff]
        %v244 = vld [vmem:[%s229 + $0x70] sm:$0xff]
        %v245 = vld [vmem:[%s229 + $0x78] sm:$0xff]
        %246 = vmatpush.msra.mxu0 %v245
        %247 = vmatpush.msra.mxu0 %v244
        %248 = vmatpush.msra.mxu0 %v243
        %249 = vmatpush.msra.mxu0 %v242
        %250 = vmatpush.msra.mxu0 %v241
        %251 = vmatpush.msra.mxu0 %v240
        %252 = vmatpush.msra.mxu0 %v239
        %253 = vmatpush.msra.mxu0 %v238
        %254 = vmatpush.msra.mxu0 %v237
        %255 = vmatpush.msra.mxu0 %v236
        %256 = vmatpush.msra.mxu0 %v235
        %257 = vmatpush.msra.mxu0 %v234
        %258 = vmatpush.msra.mxu0 %v233
        %259 = vmatpush.msra.mxu0 %v232
        %260 = vmatpush.msra.mxu0 %v231
        %261 = vmatpush.msra.mxu0 %v230
        %262 = vmatmul.f32.gmra.mxu0 %v227
        %v263 = vpop.f32.mrf.mxu0
        %v264 = vadd.f32 0.0, %v263
        %265 = vdwg.mxu0
        %v266 = vadd.f32 %v226, %v264
        %267 = vst [vmem:[%s220] sm:$0xff] %v266
        %p268 = scmp.eq.s32.totalorder %s26, 2
        // Predicated region
        $region45: #{tpu_custom_call.1} parent=31 // pred_check
          %p269 = pneg %p268
        $region46: #{tpu_custom_call.1} parent=31 // pred_check_branch
          %271 = sbr.rel (%p269) target = $region48
        $region47: #{tpu_custom_call.1} parent=31 // pred_region
          %v272 = vld [vmem:[%s220] sm:$0xff]
          %v273 = vld [vmem:[%s2] sm:$0x1]
          %v275 = vperm.slane %v273, 0
          %v277 = vadd.f32 %v272, %v275
          %278 = vst [vmem:[%s220] sm:$0xff] %v277
        $region48: #{tpu_custom_call.1} parent=31 // pred_fallthru
          _
        %s279 = sand.u32 %s111, 1
        %s280 = scalar_lea.sflag [#allocation4], %s279
        %s281 = sand.u32 %s111, 1
        %s282 = smul.addr %s281, 8
        %s283 = scalar_lea.vmem [#allocation7], %s282
        // Predicated region
        $region49: #{tpu_custom_call.1} parent=31 // pred_check
          %p284 = pneg %p121
        $region50: #{tpu_custom_call.1} parent=31 // pred_check_branch
          %286 = sbr.rel (%p284) target = $region52
        $region51: #{tpu_custom_call.1} parent=31 // pred_region
          %288 = vsyncadd %s280, 0
          %s289 = smul.addr %s25, 8
          %s290 = scalar_lea.hbm %s3, %s289
          %s292 = sshll.u32 %s283, 4
          %s293 = int_to_ptr.vmem [resolvable:$true] %s292
          %s294 = sshll.u32 %s290, 4
          %s295 = int_to_ptr.hbm [resolvable:$true] %s294
          %297 = dma.vmem_to_hbm [thread:$0]  %s293, 128, %s295, %s280
        $region52: #{tpu_custom_call.1} parent=31 // pred_fallthru
          _
      $region32: #{tpu_custom_call.1} parent=5 // pred_fallthru
        _
      %p298 = scmp.le.s32.totalorder 2, %s16
      // Predicated region
      $region53: #{tpu_custom_call.1} parent=5 // pred_check
        %p299 = pneg %p298
      $region54: #{tpu_custom_call.1} parent=5 // pred_check_branch
        %301 = sbr.rel (%p299) target = $region56
      $region55: #{tpu_custom_call.1} parent=5 // pred_region
        %s302 = ssub.s32 %s16, 2
        // Predicated region
        $region57: #{tpu_custom_call.1} parent=55 // pred_check
          %p303 = pneg %p127
        $region58: #{tpu_custom_call.1} parent=55 // pred_check_branch
          %305 = sbr.rel (%p303) target = $region60
        $region59: #{tpu_custom_call.1} parent=55 // pred_region
          %s306 = sand.u32 %s112, 1
          %s307 = scalar_lea.sflag [#allocation4], %s306
          %s308 = sand.u32 %s112, 1
          %s309 = smul.addr %s308, 8
          %s310 = scalar_lea.vmem [#allocation7], %s309
          %312 = dma.done %s307, 128
        $region60: #{tpu_custom_call.1} parent=55 // pred_fallthru
          _
      $region56: #{tpu_custom_call.1} parent=5 // pred_fallthru
        _
    $region6: #{tpu_custom_call.1} parent=1 // loop_footer
      %s20 = sadd.s32 1, %s16
    $region7: #{tpu_custom_call.1} parent=1 // loop_footer_branch
      %15 = sbr.rel target = $region3
    $region8: #{tpu_custom_call.1} parent=1 // loop_exit
      _
    %313 = vsyncpa [#allocation3], 1
    %s314 = scalar_lea.sflag [#allocation3], 1
    %315 = vsyncpa %s314, 1
    %316 = vsyncpa [#allocation6], 1
    %317 = vsyncpa [#allocation4], 1
    %s318 = scalar_lea.sflag [#allocation4], 1
    %319 = vsyncpa %s318, 1

</llo_original>
